<compile_context>
chip_gen: v7x
topology: tpu7x:2x2x1
jax: 0.10.0
libtpu: 0.0.40
codegen_flags: <defaults>
</compile_context>

<pallas_src>
import functools

import jax
import jax.numpy as jnp
from jax.experimental import pallas as pl
from jax.experimental.pallas import tpu as pltpu


_MIN_VMEM_LIMIT = 32 * 1024 * 1024  # >= default scoped limit on all generations


def _bytes(shape, dtype):
    n = 1
    for d in shape:
        n *= int(d)
    return n * jnp.dtype(dtype).itemsize


def _vmem_limit(*shape_dtypes):
    """Explicit scoped-VMEM budget: double-buffered resident blocks + slack."""
    resident = sum(_bytes(s, d) for s, d in shape_dtypes)
    return int(max(_MIN_VMEM_LIMIT, 2 * resident + (4 << 20)))


def _vmem_specs(n):
    return [pl.BlockSpec(memory_space=pltpu.MemorySpace.VMEM) for _ in range(n)]


# ---------------------------------------------------------------------------
# Pallas kernels
# ---------------------------------------------------------------------------

def _edge_selector_kernel(xc_ref, gamma_ref, beta_ref, w1t_ref, b1_ref,
                          w2_ref, b2_ref, u_ref, out_ref):
    """LayerNorm(cat[x_i,x_j]) -> Linear(64) -> ReLU -> Linear(1) -> Sigmoid -> Bernoulli.

    Transposed layout: xc is [2C, E] (edges on the lane axis); the Bernoulli
    selection mask comes out as a lane-dense [1, E] row of {0., 1.}.
    The uniform variates u ~ U[0,1) are generated outside (portable PRNG).
    """
    xc = xc_ref[...]                                              # [2C, E] f32
    mean = jnp.mean(xc, axis=0, keepdims=True)                    # [1, E]
    var = jnp.mean((xc - mean) ** 2, axis=0, keepdims=True)       # biased, as nn.LayerNorm
    xn = (xc - mean) * jax.lax.rsqrt(var + 1e-5)
    xn = xn * gamma_ref[...] + beta_ref[...]                      # affine, [2C, 1] columns
    h = jnp.dot(w1t_ref[...], xn, preferred_element_type=jnp.float32) + b1_ref[...]
    h = jnp.maximum(h, 0.0)                                       # [64, E]
    # width-1 output Linear as VPU multiply + sublane reduce (keeps the MXU free)
    s = jnp.sum(h * w2_ref[...], axis=0, keepdims=True) + b2_ref[...]   # [1, E]
    probs = jax.nn.sigmoid(s)
    # torch.bernoulli(probs): threshold pre-generated uniforms against probs
    out_ref[...] = (u_ref[...] < probs).astype(jnp.float32)       # [1, E] mask


def edge_selector(xcT, gamma, beta, w1t, b1, w2, b2, u):
    E = xcT.shape[1]
    limit = _vmem_limit((xcT.shape, xcT.dtype), ((64, E), jnp.float32),
                        ((1, E), jnp.float32), ((1, E), jnp.float32))
    return pl.pallas_call(
        _edge_selector_kernel,
        out_shape=jax.ShapeDtypeStruct((1, E), jnp.float32),
        in_specs=_vmem_specs(8),
        out_specs=pl.BlockSpec(memory_space=pltpu.MemorySpace.VMEM),
        compiler_params=pltpu.CompilerParams(vmem_limit_bytes=limit),
    )(xcT, gamma, beta, w1t, b1, w2, b2, u)


def _gcn_kernel(xt_ref, m_ref, wt_ref, b_ref, out_ref, *, apply_relu,
                contract_x_first):
    """One output-column tile of out^T = W^T @ (X^T @ A_norm^T) + b."""
    if contract_x_first:    # cheaper when C_in <= H (the N x N contraction dominates)
        xm = jnp.dot(xt_ref[...], m_ref[...], preferred_element_type=jnp.float32)
        out = jnp.dot(wt_ref[...], xm.astype(wt_ref.dtype),
                      preferred_element_type=jnp.float32)
    else:                   # cheaper when C_in > H (single-tile case only)
        wx = jnp.dot(wt_ref[...], xt_ref[...], preferred_element_type=jnp.float32)
        out = jnp.dot(wx.astype(m_ref.dtype), m_ref[...],
                      preferred_element_type=jnp.float32)
    out = out + b_ref[...]
    if apply_relu:
        out = jnp.maximum(out, 0.0)
    out_ref[...] = out


def gcn_layer(m, xT, wT, b, apply_relu):
    """m: [N,N] bf16 = A_norm^T, xT: [C,N] f32, wT: [H,C] f32, b: [H,1] f32 -> [H,N] f32."""
    N = m.shape[0]
    C, H = xT.shape[0], wT.shape[0]
    # Column-tile the dense adjacency: bounds per-step VMEM for large graphs and
    # lets the independent output-column axis shard across TensorCores (v7x).
    tn = N
    for cand in (512, 256, 128):
        if N > cand and N % cand == 0:
            tn = cand
            break
    n_tiles = N // tn
    contract_x_first = (C <= H) or (n_tiles > 1)
    xT_b = xT.astype(jnp.bfloat16)      # bf16 MXU inputs, f32 accumulation
    wT_b = wT.astype(jnp.bfloat16)
    limit = _vmem_limit(((C, N), jnp.bfloat16), ((N, tn), jnp.bfloat16),
                        ((H, C), jnp.bfloat16), ((H, tn), jnp.float32))
    return pl.pallas_call(
        functools.partial(_gcn_kernel, apply_relu=apply_relu,
                          contract_x_first=contract_x_first),
        out_shape=jax.ShapeDtypeStruct((H, N), jnp.float32),
        grid=(n_tiles,),
        in_specs=[
            pl.BlockSpec((C, N), lambda j: (0, 0)),    # X^T    (full, re-used)
            pl.BlockSpec((N, tn), lambda j: (0, j)),   # A^T    column tile
            pl.BlockSpec((H, C), lambda j: (0, 0)),    # W^T    (full)
            pl.BlockSpec((H, 1), lambda j: (0, 0)),    # bias   (full)
        ],
        out_specs=pl.BlockSpec((H, tn), lambda j: (0, j)),
        compiler_params=pltpu.CompilerParams(
            dimension_semantics=("parallel",),
            vmem_limit_bytes=limit),
    )(xT_b, m, wT_b, b)


def _head_kernel(x_ref, feats_ref, wa_ref, ba_ref,
                 wp1t_ref, bp1_ref, wp2t_ref, bp2_ref, wp3_ref, bp3_ref, out_ref):
    """Attention-weighted multi-scale fusion + prediction MLP + sigmoid (transposed)."""
    x = x_ref[...]                                                # [H, N]
    feats = feats_ref[...]                                        # [F, H, N]
    # All F attention logits in one shot; the width-1 attention Linear is a
    # VPU multiply + sublane reduce, not an F x (H->1) matmul.
    logits = jnp.sum(feats * wa_ref[...][None, :, :], axis=1) + ba_ref[...]   # [F, N]
    att = jax.nn.softmax(jax.nn.sigmoid(logits), axis=0)          # softmax over scales
    multi = jnp.sum(att[:, None, :] * feats, axis=0)              # [H, N]
    x = x + multi
    h = jnp.dot(wp1t_ref[...], x, preferred_element_type=jnp.float32) + bp1_ref[...]
    h = jnp.maximum(h, 0.0)                                       # dropout = identity (eval)
    h = jnp.dot(wp2t_ref[...], h, preferred_element_type=jnp.float32) + bp2_ref[...]
    h = jnp.maximum(h, 0.0)                                       # dropout = identity (eval)
    s = jnp.sum(h * wp3_ref[...], axis=0, keepdims=True) + bp3_ref[...]       # [1, N]
    out_ref[...] = jax.nn.sigmoid(s)                              # lane-dense [1, N]


def detector_head(xT, featsT, hp):
    H, N = xT.shape
    limit = _vmem_limit((xT.shape, xT.dtype), (featsT.shape, featsT.dtype),
                        ((H, H), jnp.float32), ((1, N), jnp.float32))
    return pl.pallas_call(
        _head_kernel,
        out_shape=jax.ShapeDtypeStruct((1, N), jnp.float32),
        in_specs=_vmem_specs(10),
        out_specs=pl.BlockSpec(memory_space=pltpu.MemorySpace.VMEM),
        compiler_params=pltpu.CompilerParams(vmem_limit_bytes=limit),
    )(xT, featsT, hp["wa"], hp["ba"], hp["wp1t"], hp["bp1"],
      hp["wp2t"], hp["bp2"], hp["wp3"], hp["bp3"])


# ---------------------------------------------------------------------------
# JAX glue: sparse graph handling (gather / scatter of the edge list)
# ---------------------------------------------------------------------------

def build_norm_adj_T(row, col, w, n):
    """Dense transposed GCN-normalized adjacency M = A_norm^T (bf16) from masked edges.

    A[t, s] = deg^{-1/2}[s] * deg^{-1/2}[t] for each selected edge (s -> t),
    plus deg^{-1}[i] on the diagonal (self loops); degrees counted on targets.
    """
    deg = jnp.zeros((n,), jnp.float32).at[col].add(w) + 1.0       # +1 for self loop
    dis = jax.lax.rsqrt(deg)
    norm = dis[row] * dis[col] * w
    m = jnp.zeros((n, n), jnp.float32).at[row, col].add(norm)     # M[source, target]
    m = m + jnp.diag(dis * dis)                                   # self-loop normalization
    return m.astype(jnp.bfloat16)                                 # bf16 MXU operand


def forward(x, edge_index, params, key):
    n = x.shape[0]
    layers = params["layers"]
    num_layers = len(layers)
    row, col = edge_index[0], edge_index[1]
    e = row.shape[0]
    keys = jax.random.split(key, num_layers)

    xT = x.T                                                      # feature-major [C, N]
    features_T = []
    for i, lp in enumerate(layers):
        # --- AdaptiveGCNLayer.select_neighbors ---
        # TODO(synk): the row/col gather + concat could be fused into the selector
        #             kernel with scalar-prefetched indices for very large E.
        xcT = jnp.concatenate([jnp.take(xT, row, axis=1),
                               jnp.take(xT, col, axis=1)], axis=0)  # [2*C_in, E]
        u = jax.random.uniform(keys[i], (1, e), jnp.float32)        # Bernoulli uniforms
        mask = edge_selector(xcT, lp["gamma"], lp["beta"], lp["w1t"], lp["b1"],
                             lp["w2"], lp["b2"], u)                 # [1, E] of {0,1}
        # --- GCNConv on the selected edges (dense normalized adjacency) ---
        m = build_norm_adj_T(row, col, mask[0], n)
        is_last = i == num_layers - 1
        xT = gcn_layer(m, xT, lp["gcn_wt"], lp["gcn_b"], apply_relu=not is_last)
        if not is_last:
            # dropout(p=0.5) in eval mode is identity
            features_T.append(xT)

    if features_T:
        featsT = jnp.stack(features_T, axis=0)                    # [F, H, N]
    else:
        # no intermediate features: zero fusion term => head sees x unchanged
        featsT = jnp.zeros((1,) + xT.shape, jnp.float32)
    outT = detector_head(xT, featsT, params["head"])              # [1, N] lane-dense
    return outT.T                                                 # [N, 1]


# ---------------------------------------------------------------------------
# Deterministic parameter init (synthetic weights, no checkpoint)
# ---------------------------------------------------------------------------

def init_params(key, in_channels, hidden_channels, num_layers):
    layers = []
    for li in range(num_layers):
        c_in = in_channels if li == 0 else hidden_channels
        c_out = hidden_channels
        key, k0, k1, k2 = jax.random.split(key, 4)
        layers.append(dict(
            gcn_wt=jax.random.normal(k0, (c_out, c_in), jnp.float32) * 0.1,   # W^T
            gcn_b=jnp.zeros((c_out, 1), jnp.float32),
            gamma=jnp.ones((2 * c_in, 1), jnp.float32),
            beta=jnp.zeros((2 * c_in, 1), jnp.float32),
            w1t=jax.random.normal(k1, (64, 2 * c_in), jnp.float32) * 0.1,
            b1=jnp.zeros((64, 1), jnp.float32),
            w2=jax.random.normal(k2, (64, 1), jnp.float32) * 0.1,
            b2=jnp.zeros((1, 1), jnp.float32),
        ))
    key, ka, kp1, kp2, kp3 = jax.random.split(key, 5)
    h, h2 = hidden_channels, hidden_channels // 2
    head = dict(
        wa=jax.random.normal(ka, (h, 1), jnp.float32) * 0.1,
        ba=jnp.zeros((1, 1), jnp.float32),
        wp1t=jax.random.normal(kp1, (h, h), jnp.float32) * 0.1,
        bp1=jnp.zeros((h, 1), jnp.float32),
        wp2t=jax.random.normal(kp2, (h2, h), jnp.float32) * 0.1,
        bp2=jnp.zeros((h2, 1), jnp.float32),
        wp3=jax.random.normal(kp3, (h2, 1), jnp.float32) * 0.1,
        bp3=jnp.zeros((1, 1), jnp.float32),
    )
    return dict(layers=layers, head=head)


# ---------------------------------------------------------------------------
# Main
# ---------------------------------------------------------------------------

if __name__ == "__main__":
    N, E = 64, 128
    in_channels, hidden_channels, num_layers = 16, 32, 3

    key = jax.random.PRNGKey(0)
    kx, ke, kp, kf = jax.random.split(key, 4)

    x = jax.random.normal(kx, (N, in_channels), jnp.float32)
    edge_index = jax.random.randint(ke, (2, E), 0, N, dtype=jnp.int32)
    params = init_params(kp, in_channels, hidden_channels, num_layers)

    out = forward(x, edge_index, params, kf)
    out = jax.block_until_ready(out)

    assert out.shape == (N, 1), out.shape
    assert bool(jnp.all(jnp.isfinite(out)))
    assert bool(jnp.all((out >= 0.0) & (out <= 1.0)))
    print("KERNEL_OK")
</pallas_src>

<mosaic_0001>
module attributes {stable_mosaic.version = 11 : i64} {
  func.func @_edge_selector_kernel(%arg0: memref<32x128xf32, #tpu.memory_space<vmem>>, %arg1: memref<32x1xf32, #tpu.memory_space<vmem>>, %arg2: memref<32x1xf32, #tpu.memory_space<vmem>>, %arg3: memref<64x32xf32, #tpu.memory_space<vmem>>, %arg4: memref<64x1xf32, #tpu.memory_space<vmem>>, %arg5: memref<64x1xf32, #tpu.memory_space<vmem>>, %arg6: memref<1x1xf32, #tpu.memory_space<vmem>>, %arg7: memref<1x128xf32, #tpu.memory_space<vmem>>, %arg8: memref<1x128xf32, #tpu.memory_space<vmem>>) attributes {dimension_semantics = [], scalar_prefetch = 0 : i64, scratch_operands = 0 : i64, tpu.core_type = #tpu.core_type<tc>} {
    %c0 = arith.constant 0 : index
    %c0_0 = arith.constant 0 : index
    %0 = vector.load %arg0[%c0, %c0_0] : memref<32x128xf32, #tpu.memory_space<vmem>>, vector<32x128xf32>
    %cst = arith.constant dense<0.000000e+00> : vector<128xf32>
    %1 = vector.multi_reduction <add>, %0, %cst [0] : vector<32x128xf32> to vector<128xf32>
    %2 = vector.shape_cast %1 : vector<128xf32> to vector<1x128xf32>
    %cst_1 = arith.constant 3.200000e+01 : f32
    %3 = vector.broadcast %cst_1 : f32 to vector<1x128xf32>
    %4 = arith.divf %2, %3 : vector<1x128xf32>
    %5 = vector.broadcast %4 : vector<1x128xf32> to vector<32x128xf32>
    %6 = arith.subf %0, %5 : vector<32x128xf32>
    %7 = arith.mulf %6, %6 : vector<32x128xf32>
    %cst_2 = arith.constant dense<0.000000e+00> : vector<128xf32>
    %8 = vector.multi_reduction <add>, %7, %cst_2 [0] : vector<32x128xf32> to vector<128xf32>
    %9 = vector.shape_cast %8 : vector<128xf32> to vector<1x128xf32>
    %cst_3 = arith.constant 3.200000e+01 : f32
    %10 = vector.broadcast %cst_3 : f32 to vector<1x128xf32>
    %11 = arith.divf %9, %10 : vector<1x128xf32>
    %12 = vector.broadcast %4 : vector<1x128xf32> to vector<32x128xf32>
    %13 = arith.subf %0, %12 : vector<32x128xf32>
    %cst_4 = arith.constant 9.99999974E-6 : f32
    %14 = vector.broadcast %cst_4 : f32 to vector<1x128xf32>
    %15 = arith.addf %11, %14 : vector<1x128xf32>
    %16 = math.rsqrt %15 : vector<1x128xf32>
    %17 = vector.broadcast %16 : vector<1x128xf32> to vector<32x128xf32>
    %18 = arith.mulf %13, %17 : vector<32x128xf32>
    %c0_5 = arith.constant 0 : index
    %c0_6 = arith.constant 0 : index
    %19 = vector.load %arg1[%c0_5, %c0_6] : memref<32x1xf32, #tpu.memory_space<vmem>>, vector<32x1xf32>
    %20 = vector.broadcast %19 : vector<32x1xf32> to vector<32x128xf32>
    %21 = arith.mulf %18, %20 : vector<32x128xf32>
    %c0_7 = arith.constant 0 : index
    %c0_8 = arith.constant 0 : index
    %22 = vector.load %arg2[%c0_7, %c0_8] : memref<32x1xf32, #tpu.memory_space<vmem>>, vector<32x1xf32>
    %23 = vector.broadcast %22 : vector<32x1xf32> to vector<32x128xf32>
    %24 = arith.addf %21, %23 : vector<32x128xf32>
    %c0_9 = arith.constant 0 : index
    %c0_10 = arith.constant 0 : index
    %25 = vector.load %arg3[%c0_9, %c0_10] : memref<64x32xf32, #tpu.memory_space<vmem>>, vector<64x32xf32>
    %cst_11 = arith.constant dense<0.000000e+00> : vector<64x128xf32>
    %26 = tpu.matmul %25, %24, %cst_11 {dimension_numbers = #tpu.dot_dimension_numbers<[1], [0], [0], [1], [0, 0, 1, 1], [], []>} : vector<64x32xf32>, vector<32x128xf32>, vector<64x128xf32> -> vector<64x128xf32>
    %c0_12 = arith.constant 0 : index
    %c0_13 = arith.constant 0 : index
    %27 = vector.load %arg4[%c0_12, %c0_13] : memref<64x1xf32, #tpu.memory_space<vmem>>, vector<64x1xf32>
    %28 = vector.broadcast %27 : vector<64x1xf32> to vector<64x128xf32>
    %29 = arith.addf %26, %28 : vector<64x128xf32>
    %cst_14 = arith.constant 0.000000e+00 : f32
    %30 = vector.broadcast %cst_14 : f32 to vector<64x128xf32>
    %31 = arith.maximumf %29, %30 : vector<64x128xf32>
    %c0_15 = arith.constant 0 : index
    %c0_16 = arith.constant 0 : index
    %32 = vector.load %arg5[%c0_15, %c0_16] : memref<64x1xf32, #tpu.memory_space<vmem>>, vector<64x1xf32>
    %33 = vector.broadcast %32 : vector<64x1xf32> to vector<64x128xf32>
    %34 = arith.mulf %31, %33 : vector<64x128xf32>
    %cst_17 = arith.constant dense<0.000000e+00> : vector<128xf32>
    %35 = vector.multi_reduction <add>, %34, %cst_17 [0] : vector<64x128xf32> to vector<128xf32>
    %36 = vector.shape_cast %35 : vector<128xf32> to vector<1x128xf32>
    %c0_18 = arith.constant 0 : index
    %c0_19 = arith.constant 0 : index
    %37 = vector.load %arg6[%c0_18, %c0_19] : memref<1x1xf32, #tpu.memory_space<vmem>>, vector<1x1xf32>
    %38 = vector.broadcast %37 : vector<1x1xf32> to vector<1x128xf32>
    %39 = arith.addf %36, %38 : vector<1x128xf32>
    %40 = arith.negf %39 : vector<1x128xf32>
    %41 = math.exp %40 : vector<1x128xf32>
    %cst_20 = arith.constant 1.000000e+00 : f32
    %42 = vector.broadcast %cst_20 : f32 to vector<1x128xf32>
    %43 = arith.addf %42, %41 : vector<1x128xf32>
    %44 = arith.divf %42, %43 : vector<1x128xf32>
    %c0_21 = arith.constant 0 : index
    %c0_22 = arith.constant 0 : index
    %45 = vector.load %arg7[%c0_21, %c0_22] : memref<1x128xf32, #tpu.memory_space<vmem>>, vector<1x128xf32>
    %46 = arith.cmpf olt, %45, %44 : vector<1x128xf32>
    %47 = arith.extui %46 : vector<1x128xi1> to vector<1x128xi32>
    %48 = arith.sitofp %47 : vector<1x128xi32> to vector<1x128xf32>
    %c0_23 = arith.constant 0 : index
    %c0_24 = arith.constant 0 : index
    %49 = vector.load %arg8[%c0_23, %c0_24] : memref<1x128xf32, #tpu.memory_space<vmem>>, vector<1x128xf32>
    tpu.vector_store %arg8[%c0_23, %c0_24], %48 {strides = array<i32>} : memref<1x128xf32, #tpu.memory_space<vmem>>, vector<1x128xf32>,
    return
  }
}

</mosaic_0001>

<llo_original>
// kernel: tpu_custom_call.1
$region0: #{tpu_custom_call.1}
  #allocation0 [shape = 'u32[]', space=smem, size = 0x4, offset = 0x4, fixed_abs, tag = 'smem constant byte address 0x4 - core index']
  #allocation1 [shape = 'u32[144,128]{1,0:T(1,128)}', space=vmem, size = 0x12000, scoped, tag = 'internal scratch']
  #allocation2 [shape = 'f32[1,1]{1,0:T(1,128)S(1)}', space=vmem, size = 0x200, scoped, tag = 'scoped memory for tpu_custom_call.1']
  %s0 = inlined_call_operand.vmem [shape: f32[32,128], index: 0, kind: input, shape index: {}]
  %s1 = inlined_call_operand.vmem [shape: f32[32,1], index: 1, kind: input, shape index: {}]
  %s2 = inlined_call_operand.vmem [shape: f32[32,1], index: 2, kind: input, shape index: {}]
  %s3 = inlined_call_operand.vmem [shape: f32[64,32], index: 3, kind: input, shape index: {}]
  %s4 = inlined_call_operand.vmem [shape: f32[64,1], index: 4, kind: input, shape index: {}]
  %s5 = inlined_call_operand.vmem [shape: f32[64,1], index: 5, kind: input, shape index: {}]
  %s6 = inlined_call_operand.<no memory space> [shape: f32[1,1], index: 6, kind: input, shape index: {}]
  %s7 = inlined_call_operand.vmem [shape: f32[1,128], index: 7, kind: input, shape index: {}]
  %s8 = inlined_call_operand.hbm [shape: f32[1,128], index: 8, kind: output, shape index: {}]
  %s9 = sld [smem:[#allocation0]]
  $region42: #{tpu_custom_call.1} parent=0
    _
  %s11 = ssub.s32 1, %s9
  %s12 = scalar_select 0, %s11, %s9
  %v13 = vstv %s6
  %14 = vst [vmem:[#allocation2] sm:$0x1] %v13
  $region1: #{tpu_custom_call.1} parent=0
    #allocation3 [shape = 'u8[512]{0}', space=vmem, size = 0x400, scoped, tag = 'output window, operand 0, single buffered']
    #allocation4 [shape = 's32[1]{0}', space=sflag, size = 0x4, scoped, tag = 'scoped memory for tpu_custom_call.1']
    %15 = vsyncpa [#allocation4], 0
    // Predicated region
    $region2: #{tpu_custom_call.1} parent=1 // pred_check
      _
    $region3: #{tpu_custom_call.1} parent=1 // pred_check_branch
      %17 = sbr.rel (0) target = $region5
    $region4: #{tpu_custom_call.1} parent=1 // pred_region
      _
    $region5: #{tpu_custom_call.1} parent=1 // pred_fallthru
      _
    // Predicated region
    $region6: #{tpu_custom_call.1} parent=1 // pred_check
      _
    $region7: #{tpu_custom_call.1} parent=1 // pred_check_branch
      %19 = sbr.rel (0) target = $region9
    $region8: #{tpu_custom_call.1} parent=1 // pred_region
      _
    $region9: #{tpu_custom_call.1} parent=1 // pred_fallthru
      _
    // Predicated region
    $region10: #{tpu_custom_call.1} parent=1 // pred_check
      _
    $region11: #{tpu_custom_call.1} parent=1 // pred_check_branch
      %21 = sbr.rel (0) target = $region13
    $region12: #{tpu_custom_call.1} parent=1 // pred_region
      _
    $region13: #{tpu_custom_call.1} parent=1 // pred_fallthru
      _
    // Predicated region
    $region14: #{tpu_custom_call.1} parent=1 // pred_check
      _
    $region15: #{tpu_custom_call.1} parent=1 // pred_check_branch
      %23 = sbr.rel (0) target = $region17
    $region16: #{tpu_custom_call.1} parent=1 // pred_region
      _
    $region17: #{tpu_custom_call.1} parent=1 // pred_fallthru
      _
    // Predicated region
    $region18: #{tpu_custom_call.1} parent=1 // pred_check
      _
    $region19: #{tpu_custom_call.1} parent=1 // pred_check_branch
      %25 = sbr.rel (0) target = $region21
    $region20: #{tpu_custom_call.1} parent=1 // pred_region
      _
    $region21: #{tpu_custom_call.1} parent=1 // pred_fallthru
      _
    // Predicated region
    $region22: #{tpu_custom_call.1} parent=1 // pred_check
      _
    $region23: #{tpu_custom_call.1} parent=1 // pred_check_branch
      %27 = sbr.rel (0) target = $region25
    $region24: #{tpu_custom_call.1} parent=1 // pred_region
      _
    $region25: #{tpu_custom_call.1} parent=1 // pred_fallthru
      _
    // Predicated region
    $region26: #{tpu_custom_call.1} parent=1 // pred_check
      _
    $region27: #{tpu_custom_call.1} parent=1 // pred_check_branch
      %29 = sbr.rel (0) target = $region29
    $region28: #{tpu_custom_call.1} parent=1 // pred_region
      _
    $region29: #{tpu_custom_call.1} parent=1 // pred_fallthru
      _
    // Predicated region
    $region30: #{tpu_custom_call.1} parent=1 // pred_check
      _
    $region31: #{tpu_custom_call.1} parent=1 // pred_check_branch
      %31 = sbr.rel (0) target = $region33
    $region32: #{tpu_custom_call.1} parent=1 // pred_region
      _
    $region33: #{tpu_custom_call.1} parent=1 // pred_fallthru
      _
    %v32 = vld [vmem:[%s0] sm:$0xff]
    %v33 = vld [vmem:[%s0 + $0x8] sm:$0xff]
    %v34 = vld [vmem:[%s0 + $0x10] sm:$0xff]
    %v35 = vld [vmem:[%s0 + $0x18] sm:$0xff]
    %v36 = vadd.f32 %v32, %v33
    %v37 = vadd.f32 %v36, %v34
    %v38 = vadd.f32 %v37, %v35
    %v39 = vrot.slane %v38, 4
    %v40 = vadd.f32 %v38, %v39
    %v41 = vrot.slane %v40, 2
    %v42 = vadd.f32 %v40, %v41
    %v43 = vrot.slane %v42, 1
    %v44 = vadd.f32 %v42, %v43
    %v45 = vrcp.pop 32.0
    %v46 = vmul.f32 %v44, %v45
    %v47 = vsub.f32 %v32, %v46
    %v48 = vsub.f32 %v33, %v46
    %v49 = vsub.f32 %v34, %v46
    %v50 = vsub.f32 %v35, %v46
    %v51 = vmul.f32 %v47, %v47
    %v52 = vmul.f32 %v48, %v48
    %v53 = vmul.f32 %v49, %v49
    %v54 = vmul.f32 %v50, %v50
    %v55 = vadd.f32 %v51, %v52
    %v56 = vadd.f32 %v55, %v53
    %v57 = vadd.f32 %v56, %v54
    %v58 = vrot.slane %v57, 4
    %v59 = vadd.f32 %v57, %v58
    %v60 = vrot.slane %v59, 2
    %v61 = vadd.f32 %v59, %v60
    %v62 = vrot.slane %v61, 1
    %v63 = vadd.f32 %v61, %v62
    %v64 = vmul.f32 %v63, %v45
    %v65 = vadd.f32 %v64, 1e-05
    %v66 = vrsqrt.pop %v65
    %v67 = vmul.f32 %v47, %v66
    %v68 = vmul.f32 %v48, %v66
    %v69 = vmul.f32 %v49, %v66
    %v70 = vmul.f32 %v50, %v66
    %v71 = vld [vmem:[%s1] sm:$0xff]
    %v72 = vld [vmem:[%s1 + $0x8] sm:$0xff]
    %v73 = vld [vmem:[%s1 + $0x10] sm:$0xff]
    %v74 = vld [vmem:[%s1 + $0x18] sm:$0xff]
    %76 = vset.pattern.permute.xlu0 0
    %77 = vperm.xlu0 %76, %v71
    %v78 = vpop.permute.xlu0 %77
    %81 = vset.pattern.permute.xlu0 0
    %82 = vperm.xlu0 %81, %v72
    %v83 = vpop.permute.xlu0 %82
    %86 = vset.pattern.permute.xlu0 0
    %87 = vperm.xlu0 %86, %v73
    %v88 = vpop.permute.xlu0 %87
    %91 = vset.pattern.permute.xlu0 0
    %92 = vperm.xlu0 %91, %v74
    %v93 = vpop.permute.xlu0 %92
    %v95 = vmul.f32 %v67, %v78
    %v96 = vmul.f32 %v68, %v83
    %v97 = vmul.f32 %v69, %v88
    %v98 = vmul.f32 %v70, %v93
    %v99 = vld [vmem:[%s2] sm:$0xff]
    %v100 = vld [vmem:[%s2 + $0x8] sm:$0xff]
    %v101 = vld [vmem:[%s2 + $0x10] sm:$0xff]
    %v102 = vld [vmem:[%s2 + $0x18] sm:$0xff]
    %104 = vset.pattern.permute.xlu0 0
    %105 = vperm.xlu0 %104, %v99
    %v106 = vpop.permute.xlu0 %105
    %109 = vset.pattern.permute.xlu0 0
    %110 = vperm.xlu0 %109, %v100
    %v111 = vpop.permute.xlu0 %110
    %114 = vset.pattern.permute.xlu0 0
    %115 = vperm.xlu0 %114, %v101
    %v116 = vpop.permute.xlu0 %115
    %119 = vset.pattern.permute.xlu0 0
    %120 = vperm.xlu0 %119, %v102
    %v121 = vpop.permute.xlu0 %120
    %v123 = vadd.f32 %v95, %v106
    %v124 = vadd.f32 %v96, %v111
    %v125 = vadd.f32 %v97, %v116
    %v126 = vadd.f32 %v98, %v121
    %v127 = vld [vmem:[%s3] sm:$0xff]
    %v128 = vld [vmem:[%s3 + $0x8] sm:$0xff]
    %v129 = vld [vmem:[%s3 + $0x10] sm:$0xff]
    %v130 = vld [vmem:[%s3 + $0x18] sm:$0xff]
    %v131 = vld [vmem:[%s3 + $0x20] sm:$0xff]
    %v132 = vld [vmem:[%s3 + $0x28] sm:$0xff]
    %v133 = vld [vmem:[%s3 + $0x30] sm:$0xff]
    %v134 = vld [vmem:[%s3 + $0x38] sm:$0xff]
    %v135 = vld [vmem:[%s4] sm:$0xff]
    %v136 = vld [vmem:[%s4 + $0x8] sm:$0xff]
    %v137 = vld [vmem:[%s4 + $0x10] sm:$0xff]
    %v138 = vld [vmem:[%s4 + $0x18] sm:$0xff]
    %v139 = vld [vmem:[%s4 + $0x20] sm:$0xff]
    %v140 = vld [vmem:[%s4 + $0x28] sm:$0xff]
    %v141 = vld [vmem:[%s4 + $0x30] sm:$0xff]
    %v142 = vld [vmem:[%s4 + $0x38] sm:$0xff]
    %144 = vset.pattern.permute.xlu0 0
    %145 = vperm.xlu0 %144, %v135
    %v146 = vpop.permute.xlu0 %145
    %149 = vset.pattern.permute.xlu0 0
    %150 = vperm.xlu0 %149, %v136
    %v151 = vpop.permute.xlu0 %150
    %154 = vset.pattern.permute.xlu0 0
    %155 = vperm.xlu0 %154, %v137
    %v156 = vpop.permute.xlu0 %155
    %159 = vset.pattern.permute.xlu0 0
    %160 = vperm.xlu0 %159, %v138
    %v161 = vpop.permute.xlu0 %160
    %164 = vset.pattern.permute.xlu0 0
    %165 = vperm.xlu0 %164, %v139
    %v166 = vpop.permute.xlu0 %165
    %169 = vset.pattern.permute.xlu0 0
    %170 = vperm.xlu0 %169, %v140
    %v171 = vpop.permute.xlu0 %170
    %174 = vset.pattern.permute.xlu0 0
    %175 = vperm.xlu0 %174, %v141
    %v176 = vpop.permute.xlu0 %175
    %179 = vset.pattern.permute.xlu0 0
    %180 = vperm.xlu0 %179, %v142
    %v181 = vpop.permute.xlu0 %180
    %vm183 = vcmask 261120
    %v185 = vsel %vm183, %v127, 0
    %v188 = vsel %vm183, %v128, 0
    %v191 = vsel %vm183, %v129, 0
    %v194 = vsel %vm183, %v130, 0
    %v197 = vsel %vm183, %v131, 0
    %v200 = vsel %vm183, %v132, 0
    %v203 = vsel %vm183, %v133, 0
    %v206 = vsel %vm183, %v134, 0
    %208 = vmatprep.subr.mxu0 0.0
    %209 = vmatpush1.msra.mxu0 %v123
    %210 = vmatprep.subr.mxu0 0.0
    %211 = vmatpush1.msra.mxu0 %v124
    %212 = vmatprep.subr.mxu0 0.0
    %213 = vmatpush1.msra.mxu0 %v125
    %214 = vmatprep.subr.mxu0 0.0
    %215 = vmatpush1.msra.mxu0 %v126
    %216 = vmatprep.subr.mxu0 0.0
    %217 = vmatpush1.msra.mxu0 0.0
    %218 = vmatprep.subr.mxu0 0.0
    %219 = vmatpush1.msra.mxu0 0.0
    %220 = vmatprep.subr.mxu0 0.0
    %221 = vmatpush1.msra.mxu0 0.0
    %222 = vmatprep.subr.mxu0 0.0
    %223 = vmatpush1.msra.mxu0 0.0
    %224 = vmatprep.subr.mxu0 0.0
    %225 = vmatpush1.msra.mxu0 0.0
    %226 = vmatprep.subr.mxu0 0.0
    %227 = vmatpush1.msra.mxu0 0.0
    %228 = vmatprep.subr.mxu0 0.0
    %229 = vmatpush1.msra.mxu0 0.0
    %230 = vmatprep.subr.mxu0 0.0
    %231 = vmatpush1.msra.mxu0 0.0
    %232 = vmatprep.subr.mxu0 0.0
    %233 = vmatpush1.msra.mxu0 0.0
    %234 = vmatprep.subr.mxu0 0.0
    %235 = vmatpush1.msra.mxu0 0.0
    %236 = vmatprep.subr.mxu0 0.0
    %237 = vmatpush1.msra.mxu0 0.0
    %238 = vmatprep.subr.mxu0 0.0
    %239 = vmatpush1.msra.mxu0 0.0
    %240 = vmatprep.subr.mxu0 0.0
    %241 = vmatpush1.msra.mxu0 0.0
    %242 = vmatprep.subr.mxu0 0.0
    %243 = vmatpush1.msra.mxu0 0.0
    %244 = vmatprep.subr.mxu0 0.0
    %245 = vmatpush1.msra.mxu0 0.0
    %246 = vmatprep.subr.mxu0 0.0
    %247 = vmatpush1.msra.mxu0 0.0
    %248 = vmatprep.subr.mxu0 0.0
    %249 = vmatpush1.msra.mxu0 0.0
    %250 = vmatprep.subr.mxu0 0.0
    %251 = vmatpush1.msra.mxu0 0.0
    %252 = vmatprep.subr.mxu0 0.0
    %253 = vmatpush1.msra.mxu0 0.0
    %254 = vmatprep.subr.mxu0 0.0
    %255 = vmatpush1.msra.mxu0 0.0
    %256 = vmatprep.subr.mxu0 0.0
    %257 = vmatpush1.msra.mxu0 0.0
    %258 = vmatprep.subr.mxu0 0.0
    %259 = vmatpush1.msra.mxu0 0.0
    %260 = vmatprep.subr.mxu0 0.0
    %261 = vmatpush1.msra.mxu0 0.0
    %262 = vmatprep.subr.mxu0 0.0
    %263 = vmatpush1.msra.mxu0 0.0
    %264 = vmatprep.subr.mxu0 0.0
    %265 = vmatpush1.msra.mxu0 0.0
    %266 = vmatprep.subr.mxu0 0.0
    %267 = vmatpush1.msra.mxu0 0.0
    %268 = vmatprep.subr.mxu0 0.0
    %269 = vmatpush1.msra.mxu0 0.0
    %270 = vmatprep.subr.mxu0 0.0
    %271 = vmatpush1.msra.mxu0 0.0
    %272 = vmatprep.mubr.f32.mxu0 0.0
    %273 = vmatmul.mubr.f32.gmra.mrb[0].mxu0 %v185
    %v274 = vpop.f32.mrb[0].mxu0
    %v275 = vadd.f32 %v146, %v274
    %v276 = vpop.f32.mrb[0].mxu0
    %277 = vmatprep.mubr.f32.mxu0 0.0
    %278 = vmatmul.mubr.f32.gmra.mrb[0].mxu0 %v188
    %v279 = vpop.f32.mrb[0].mxu0
    %v280 = vadd.f32 %v151, %v279
    %v281 = vpop.f32.mrb[0].mxu0
    %282 = vmatprep.mubr.f32.mxu0 0.0
    %283 = vmatmul.mubr.f32.gmra.mrb[0].mxu0 %v191
    %v284 = vpop.f32.mrb[0].mxu0
    %v285 = vadd.f32 %v156, %v284
    %v286 = vpop.f32.mrb[0].mxu0
    %287 = vmatprep.mubr.f32.mxu0 0.0
    %288 = vmatmul.mubr.f32.gmra.mrb[0].mxu0 %v194
    %v289 = vpop.f32.mrb[0].mxu0
    %v290 = vadd.f32 %v161, %v289
    %v291 = vpop.f32.mrb[0].mxu0
    %292 = vmatprep.mubr.f32.mxu0 0.0
    %293 = vmatmul.mubr.f32.gmra.mrb[0].mxu0 %v197
    %v294 = vpop.f32.mrb[0].mxu0
    %v295 = vadd.f32 %v166, %v294
    %v296 = vpop.f32.mrb[0].mxu0
    %297 = vmatprep.mubr.f32.mxu0 0.0
    %298 = vmatmul.mubr.f32.gmra.mrb[0].mxu0 %v200
    %v299 = vpop.f32.mrb[0].mxu0
    %v300 = vadd.f32 %v171, %v299
    %v301 = vpop.f32.mrb[0].mxu0
    %302 = vmatprep.mubr.f32.mxu0 0.0
    %303 = vmatmul.mubr.f32.gmra.mrb[0].mxu0 %v203
    %v304 = vpop.f32.mrb[0].mxu0
    %v305 = vadd.f32 %v176, %v304
    %v306 = vpop.f32.mrb[0].mxu0
    %307 = vmatprep.mubr.f32.mxu0 0.0
    %308 = vmatmul.mubr.f32.gmra.mrb[0].mxu0 %v206
    %v309 = vpop.f32.mrb[0].mxu0
    %v310 = vadd.f32 %v181, %v309
    %v311 = vpop.f32.mrb[0].mxu0
    %312 = vdwg.mxu0
    %v313 = vmax.f32 %v275, 0.0
    %v314 = vmax.f32 %v280, 0.0
    %v315 = vmax.f32 %v285, 0.0
    %v316 = vmax.f32 %v290, 0.0
    %v317 = vmax.f32 %v295, 0.0
    %v318 = vmax.f32 %v300, 0.0
    %v319 = vmax.f32 %v305, 0.0
    %v320 = vmax.f32 %v310, 0.0
    %v321 = vld [vmem:[%s5] sm:$0xff]
    %v322 = vld [vmem:[%s5 + $0x8] sm:$0xff]
    %v323 = vld [vmem:[%s5 + $0x10] sm:$0xff]
    %v324 = vld [vmem:[%s5 + $0x18] sm:$0xff]
    %v325 = vld [vmem:[%s5 + $0x20] sm:$0xff]
    %v326 = vld [vmem:[%s5 + $0x28] sm:$0xff]
    %v327 = vld [vmem:[%s5 + $0x30] sm:$0xff]
    %v328 = vld [vmem:[%s5 + $0x38] sm:$0xff]
    %330 = vset.pattern.permute.xlu0 0
    %331 = vperm.xlu0 %330, %v321
    %v332 = vpop.permute.xlu0 %331
    %335 = vset.pattern.permute.xlu0 0
    %336 = vperm.xlu0 %335, %v322
    %v337 = vpop.permute.xlu0 %336
    %340 = vset.pattern.permute.xlu0 0
    %341 = vperm.xlu0 %340, %v323
    %v342 = vpop.permute.xlu0 %341
    %345 = vset.pattern.permute.xlu0 0
    %346 = vperm.xlu0 %345, %v324
    %v347 = vpop.permute.xlu0 %346
    %350 = vset.pattern.permute.xlu0 0
    %351 = vperm.xlu0 %350, %v325
    %v352 = vpop.permute.xlu0 %351
    %355 = vset.pattern.permute.xlu0 0
    %356 = vperm.xlu0 %355, %v326
    %v357 = vpop.permute.xlu0 %356
    %360 = vset.pattern.permute.xlu0 0
    %361 = vperm.xlu0 %360, %v327
    %v362 = vpop.permute.xlu0 %361
    %365 = vset.pattern.permute.xlu0 0
    %366 = vperm.xlu0 %365, %v328
    %v367 = vpop.permute.xlu0 %366
    %v369 = vmul.f32 %v313, %v332
    %v370 = vmul.f32 %v314, %v337
    %v371 = vmul.f32 %v315, %v342
    %v372 = vmul.f32 %v316, %v347
    %v373 = vmul.f32 %v317, %v352
    %v374 = vmul.f32 %v318, %v357
    %v375 = vmul.f32 %v319, %v362
    %v376 = vmul.f32 %v320, %v367
    %v377 = vadd.f32 %v369, %v370
    %v378 = vadd.f32 %v377, %v371
    %v379 = vadd.f32 %v378, %v372
    %v380 = vadd.f32 %v379, %v373
    %v381 = vadd.f32 %v380, %v374
    %v382 = vadd.f32 %v381, %v375
    %v383 = vadd.f32 %v382, %v376
    %v384 = vrot.slane %v383, 4
    %v385 = vadd.f32 %v383, %v384
    %v386 = vrot.slane %v385, 2
    %v387 = vadd.f32 %v385, %v386
    %v388 = vrot.slane %v387, 1
    %v389 = vadd.f32 %v387, %v388
    %v390 = vld [vmem:[#allocation2] sm:$0x1]
    %392 = vset.pattern.permute.xlu0 0
    %393 = vperm.xlu0 %392, %v390
    %v394 = vpop.permute.xlu0 %393
    %v396 = vlaneseq
    %v397 = vshrl.u32 %v396, 7
    %v398 = vsub.s32 0, %v397
    %v399 = vrot.slane %v394, %v398
    %v400 = vadd.f32 %v389, %v399
    %v401 = vxor.u32 %v400, 2147483648
    %v402 = vmul.f32 %v401, 1.442695
    %v403 = vpow.pop %v402
    %v404 = vadd.f32 %v403, 1.0
    %v405 = vrcp.pop %v404
    %v406 = vmul.f32 1.0, %v405
    %v407 = vld [vmem:[%s7] sm:$0x1]
    %vm408 = vcmp.lt.f32.partialorder %v407, %v406
    %v409 = vsel %vm408, 1, 0
    %v410 = vcvt.s32.f32 %v409
    %411 = vst [vmem:[#allocation3] sm:$0x1] %v410
    // Predicated region
    $region34: #{tpu_custom_call.1} parent=1 // pred_check
      _
    $region35: #{tpu_custom_call.1} parent=1 // pred_check_branch
      %413 = sbr.rel (0) target = $region37
    $region36: #{tpu_custom_call.1} parent=1 // pred_region
      %s415 = ssub.s32 16, 16
      %416 = vsyncadd [#allocation4], %s415
      %s418 = sshll.u32 [#allocation3], 4
      %s419 = int_to_ptr.vmem [resolvable:$true] %s418
      %421 = dma.vmem_to_hbm [thread:$0]  %s419, 16, %s8, [#allocation4]
    $region37: #{tpu_custom_call.1} parent=1 // pred_fallthru
      _
    // Predicated region
    $region38: #{tpu_custom_call.1} parent=1 // pred_check
      _
    $region39: #{tpu_custom_call.1} parent=1 // pred_check_branch
      %423 = sbr.rel (0) target = $region41
    $region40: #{tpu_custom_call.1} parent=1 // pred_region
      %424 = dma.done [#allocation4], 16
    $region41: #{tpu_custom_call.1} parent=1 // pred_fallthru
      _
    %425 = vsyncpa [#allocation4], 1

</llo_original>
